<compile_context>
chip_gen: v7x
topology: tpu7x:2x2x1
jax: 0.10.0
libtpu: 0.0.40
codegen_flags: <defaults>
</compile_context>

<pallas_src>
import numpy as np
import jax
import jax.numpy as jnp
from jax.experimental import pallas as pl
from jax.experimental.pallas import tpu as pltpu

_K_PAD = 8  # contraction width: n_axes position columns + 1 ones/phase column, padded to 8


def _build_table(axes_dim, theta, num_frames, k):
    """Host-side (numpy, f64) construction of the (8, 4*Dh) coefficient table.

    Row a < n_axes : omega of rope-axis a, repeated over each group of 4 lanes that
                     belongs to one of its head-dim slots (0 elsewhere).
    Row n_axes     : per-lane phase [0, +pi/2, -pi/2, 0]  (hit by the ones column of the
                     augmented positions), so cos(angle + phase) == [cos, -sin, sin, cos].
    Rows n_axes+1..7 : zeros (K padding for the MXU dot).
    """
    n_axes = len(axes_dim)
    assert n_axes + 1 <= _K_PAD
    omegas = []
    for i, d in enumerate(axes_dim):
        assert d % 2 == 0
        scale = np.linspace(0.0, (d - 2) / d, num=d // 2, dtype=np.float64)
        omega = 1.0 / theta ** scale
        # RifleX: only the first (temporal) axis gets the frequency override.
        if i == 0 and k > 0 and num_frames:
            omega[k - 1] = 0.9 * 2.0 * np.pi / num_frames
        omegas.append(omega)
    dh = sum(d // 2 for d in axes_dim)
    w = 4 * dh

    tab = np.zeros((_K_PAD, w), dtype=np.float64)
    off = 0
    for a, om in enumerate(omegas):
        cols = 4 * (off + np.arange(om.shape[0]))
        for j in range(4):
            tab[a, cols + j] = om
        off += om.shape[0]
    tab[n_axes, :] = np.tile(np.array([0.0, np.pi / 2, -np.pi / 2, 0.0]), dh)
    return jnp.asarray(tab.astype(np.float32)), dh


def _rope_kernel(pos_ref, tab_ref, out_ref):
    # pos_ref: (tn, 8)    f32  -- [x, y, z, 1, 0, 0, 0, 0] per token
    # tab_ref: (8, 4*Dh)  f32  -- omega rows + sign-folded phase row
    # out_ref: (tn, 4*Dh) f32  -- final interleaved [c, -s, s, c] layout (lane-dense)
    #
    # Angle contraction + phase add on the MXU (vex slot, otherwise idle); the only
    # VPU/EUP work left is the single cos() pass feeding one unmasked full-width store.
    ang = jnp.dot(pos_ref[...], tab_ref[...], preferred_element_type=jnp.float32)
    out_ref[...] = jnp.cos(ang)


def embed_nd_riflex(ids, *, axes_dim, theta, num_frames, k, tile_n=4096):
    """Pallas implementation of EmbedND_RifleX.forward.

    ids: (B, N, n_axes) integer positions.
    returns: (B, 1, N, sum(axes_dim)//2, 2, 2) float32

    tile_n: tokens per grid step.  4096 (~8 MiB double-buffered VMEM) is safe on every
    chip incl. v5e's 16 MiB default scoped limit; raise to 8192-16384 on v7x to amortize
    per-step overhead (vmem_limit_bytes scales with it automatically).
    """
    B, N, n_axes = ids.shape
    assert n_axes == len(axes_dim)
    tab, dh = _build_table(axes_dim, theta, num_frames, k)
    w = 4 * dh

    # Flatten (B, N) -> one grid axis: one ragged tile total, better 2-TC balance.
    bn = B * N
    pos = ids.reshape(bn, n_axes).astype(jnp.float32)  # exact up to 2^24, same as reference
    pos_aug = jnp.concatenate(
        [pos,
         jnp.ones((bn, 1), jnp.float32),                       # drives the phase row
         jnp.zeros((bn, _K_PAD - n_axes - 1), jnp.float32)],   # K padding
        axis=-1)

    # Token tile: whole bn if small, else a sublane-friendly tile.  Pallas masks the
    # ragged last tile when bn % tn != 0 (no host-side padding needed).
    tn = bn if bn <= tile_n else tile_n
    if tn != bn:
        assert tn % 8 == 0

    # Double-buffered VMEM: pos block pads 8 -> 128 lanes, output block is w (lane) wide.
    w_pad = -(-w // 128) * 128
    vmem_need = 2 * tn * (128 + w_pad) * 4 + 2 * _K_PAD * w_pad * 4

    cost = pl.CostEstimate(
        flops=2 * _K_PAD * w * bn,          # MXU contraction
        transcendentals=w * bn,             # one cos per output element
        bytes_accessed=pos_aug.size * 4 + tab.size * 4 + bn * w * 4)

    out = pl.pallas_call(
        _rope_kernel,
        out_shape=jax.ShapeDtypeStruct((bn, w), jnp.float32),
        grid=(pl.cdiv(bn, tn),),
        in_specs=[
            pl.BlockSpec((tn, _K_PAD), lambda i: (i, 0)),
            pl.BlockSpec((_K_PAD, w), lambda i: (0, 0)),   # tiny table, constant block
        ],
        out_specs=pl.BlockSpec((tn, w), lambda i: (i, 0)),
        compiler_params=pltpu.CompilerParams(
            dimension_semantics=("parallel",),
            vmem_limit_bytes=vmem_need + (8 << 20)),
        cost_estimate=cost,
    )(pos_aug, tab)

    # (bn, 4*Dh) is byte-identical to (B, N, Dh, 2, 2): pure reshape, no HBM transpose.
    return out.reshape(B, 1, N, dh, 2, 2)


def _reference(ids, *, axes_dim, theta, num_frames, k):
    """Pure-JAX reference mirroring the PyTorch module (f32 angle math, direct sin/cos)."""
    pos = ids.astype(jnp.float32)                              # (B, N, n_axes)
    outs = []
    for i, d in enumerate(axes_dim):
        scale = np.linspace(0.0, (d - 2) / d, num=d // 2, dtype=np.float64)
        omega = 1.0 / theta ** scale
        if i == 0 and k > 0 and num_frames:
            omega[k - 1] = 0.9 * 2.0 * np.pi / num_frames
        omega = jnp.asarray(omega.astype(np.float32))
        ang = pos[..., i:i + 1] * omega[None, None, :]         # (B, N, d//2)
        c, s = jnp.cos(ang), jnp.sin(ang)
        outs.append(jnp.stack([c, -s, s, c], axis=-1))         # (B, N, d//2, 4)
    out = jnp.concatenate(outs, axis=-2)                       # (B, N, Dh, 4)
    B, N, Dh, _ = out.shape
    return out.reshape(B, N, Dh, 2, 2)[:, None]


if __name__ == "__main__":
    # Small config: dim = 64 split as axes_dim=[16, 24, 24] (temporal axis first).
    axes_dim = [16, 24, 24]
    theta = 10000.0
    num_frames = 16
    k = 2

    key = jax.random.PRNGKey(0)
    B, N = 2, 8
    ids = jax.random.randint(key, (B, N, len(axes_dim)), 0, 32, dtype=jnp.int32)

    out = embed_nd_riflex(ids, axes_dim=axes_dim, theta=theta,
                          num_frames=num_frames, k=k)
    out = jax.block_until_ready(out)

    ref = _reference(ids, axes_dim=axes_dim, theta=theta,
                     num_frames=num_frames, k=k)

    assert out.shape == (B, 1, N, sum(axes_dim) // 2, 2, 2), out.shape
    assert out.dtype == jnp.float32
    # MXU f32 contraction + phase-folded sin deviate from the direct f32 reference by a
    # few ulp of the angle; well inside 2e-5 at these shapes.
    np.testing.assert_allclose(np.asarray(out), np.asarray(ref), rtol=2e-5, atol=2e-5)

    print("KERNEL_OK")
</pallas_src>

<mosaic_0001>
module attributes {stable_mosaic.version = 11 : i64} {
  func.func @_rope_kernel(%arg0: i32, %arg1: memref<16x8xf32, #tpu.memory_space<vmem>>, %arg2: memref<8x128xf32, #tpu.memory_space<vmem>>, %arg3: memref<16x128xf32, #tpu.memory_space<vmem>>) attributes {dimension_semantics = [#tpu.dimension_semantics<parallel>], iteration_bounds = array<i64: 1>, scalar_prefetch = 0 : i64, scratch_operands = 0 : i64, tpu.core_type = #tpu.core_type<tc>, window_params = [{transform_indices = @transform_0, window_bounds = array<i64: 16, 8>}, {pipeline_mode = #tpu.pipeline_mode<synchronous>, transform_indices = @transform_1, window_bounds = array<i64: 8, 128>}, {transform_indices = @transform_2, window_bounds = array<i64: 16, 128>}]} {
    %c0 = arith.constant 0 : index
    %c0_0 = arith.constant 0 : index
    %0 = vector.load %arg1[%c0, %c0_0] : memref<16x8xf32, #tpu.memory_space<vmem>>, vector<16x8xf32>
    %c0_1 = arith.constant 0 : index
    %c0_2 = arith.constant 0 : index
    %1 = vector.load %arg2[%c0_1, %c0_2] : memref<8x128xf32, #tpu.memory_space<vmem>>, vector<8x128xf32>
    %cst = arith.constant dense<0.000000e+00> : vector<16x128xf32>
    %2 = tpu.matmul %0, %1, %cst {dimension_numbers = #tpu.dot_dimension_numbers<[1], [0], [0], [1], [0, 0, 1, 1], [], []>} : vector<16x8xf32>, vector<8x128xf32>, vector<16x128xf32> -> vector<16x128xf32>
    %3 = math.cos %2 : vector<16x128xf32>
    %c0_3 = arith.constant 0 : index
    %c0_4 = arith.constant 0 : index
    %4 = vector.load %arg3[%c0_3, %c0_4] : memref<16x128xf32, #tpu.memory_space<vmem>>, vector<16x128xf32>
    tpu.vector_store %arg3[%c0_3, %c0_4], %3 {strides = array<i32>} : memref<16x128xf32, #tpu.memory_space<vmem>>, vector<16x128xf32>,
    return
  }
  func.func @transform_0(%arg0: i32) -> (i32, i32) {
    %c0_i32 = arith.constant 0 : i32
    %c0_i32_0 = arith.constant 0 : i32
    return %arg0, %c0_i32 : i32, i32
  }
  func.func @transform_1(%arg0: i32) -> (i32, i32) {
    %c0_i32 = arith.constant 0 : i32
    %c0_i32_0 = arith.constant 0 : i32
    %c0_i32_1 = arith.constant 0 : i32
    return %c0_i32, %c0_i32_0 : i32, i32
  }
  func.func @transform_2(%arg0: i32) -> (i32, i32) {
    %c0_i32 = arith.constant 0 : i32
    %c0_i32_0 = arith.constant 0 : i32
    return %arg0, %c0_i32 : i32, i32
  }
}

</mosaic_0001>

<llo_original>
// kernel: tpu_custom_call.1
$region0: #{tpu_custom_call.1}
  #allocation0 [shape = 'u32[]', space=smem, size = 0x4, offset = 0x4, fixed_abs, tag = 'smem constant byte address 0x4 - core index']
  #allocation1 [shape = 'u32[144,128]{1,0:T(1,128)}', space=vmem, size = 0x12000, scoped, tag = 'internal scratch']
  %s0 = inlined_call_operand.vmem [shape: f32[16,8], index: 0, kind: input, shape index: {}]
  %s1 = inlined_call_operand.vmem [shape: f32[8,128], index: 1, kind: input, shape index: {}]
  %s2 = inlined_call_operand.hbm [shape: f32[16,128], index: 2, kind: output, shape index: {}]
  %s3 = sld [smem:[#allocation0]]
  $region18: #{tpu_custom_call.1} parent=0
    _
  %s5 = ssub.s32 1, %s3
  %s6 = scalar_select 0, %s5, %s3
  $region1: #{tpu_custom_call.1} parent=0
    #allocation2 [shape = 'u8[8192]{0}', space=vmem, size = 0x2000, scoped, tag = 'output window, operand 0, single buffered']
    #allocation3 [shape = 's32[1]{0}', space=sflag, size = 0x4, scoped, tag = 'scoped memory for tpu_custom_call.1']
    %7 = vsyncpa [#allocation3], 0
    // Predicated region
    $region2: #{tpu_custom_call.1} parent=1 // pred_check
      _
    $region3: #{tpu_custom_call.1} parent=1 // pred_check_branch
      %9 = sbr.rel (0) target = $region5
    $region4: #{tpu_custom_call.1} parent=1 // pred_region
      _
    $region5: #{tpu_custom_call.1} parent=1 // pred_fallthru
      _
    // Predicated region
    $region6: #{tpu_custom_call.1} parent=1 // pred_check
      _
    $region7: #{tpu_custom_call.1} parent=1 // pred_check_branch
      %11 = sbr.rel (0) target = $region9
    $region8: #{tpu_custom_call.1} parent=1 // pred_region
      _
    $region9: #{tpu_custom_call.1} parent=1 // pred_fallthru
      _
    %v12 = vld [vmem:[%s0] sm:$0xff]
    %v13 = vld [vmem:[%s0 + $0x8] sm:$0xff]
    %v14 = vld [vmem:[%s1] sm:$0xff]
    %vm15 = vcmask 64512
    %v17 = vsel %vm15, %v12, 0
    %v20 = vsel %vm15, %v13, 0
    %22 = vmatprep.subr.mxu0 0.0
    %23 = vmatpush1.msra.mxu0 %v14
    %24 = vmatprep.subr.mxu0 0.0
    %25 = vmatpush1.msra.mxu0 0.0
    %26 = vmatprep.subr.mxu0 0.0
    %27 = vmatpush1.msra.mxu0 0.0
    %28 = vmatprep.subr.mxu0 0.0
    %29 = vmatpush1.msra.mxu0 0.0
    %30 = vmatprep.subr.mxu0 0.0
    %31 = vmatpush1.msra.mxu0 0.0
    %32 = vmatprep.subr.mxu0 0.0
    %33 = vmatpush1.msra.mxu0 0.0
    %34 = vmatprep.subr.mxu0 0.0
    %35 = vmatpush1.msra.mxu0 0.0
    %36 = vmatprep.subr.mxu0 0.0
    %37 = vmatpush1.msra.mxu0 0.0
    %38 = vmatprep.subr.mxu0 0.0
    %39 = vmatpush1.msra.mxu0 0.0
    %40 = vmatprep.subr.mxu0 0.0
    %41 = vmatpush1.msra.mxu0 0.0
    %42 = vmatprep.subr.mxu0 0.0
    %43 = vmatpush1.msra.mxu0 0.0
    %44 = vmatprep.subr.mxu0 0.0
    %45 = vmatpush1.msra.mxu0 0.0
    %46 = vmatprep.subr.mxu0 0.0
    %47 = vmatpush1.msra.mxu0 0.0
    %48 = vmatprep.subr.mxu0 0.0
    %49 = vmatpush1.msra.mxu0 0.0
    %50 = vmatprep.subr.mxu0 0.0
    %51 = vmatpush1.msra.mxu0 0.0
    %52 = vmatprep.subr.mxu0 0.0
    %53 = vmatpush1.msra.mxu0 0.0
    %54 = vmatprep.subr.mxu0 0.0
    %55 = vmatpush1.msra.mxu0 0.0
    %56 = vmatprep.subr.mxu0 0.0
    %57 = vmatpush1.msra.mxu0 0.0
    %58 = vmatprep.subr.mxu0 0.0
    %59 = vmatpush1.msra.mxu0 0.0
    %60 = vmatprep.subr.mxu0 0.0
    %61 = vmatpush1.msra.mxu0 0.0
    %62 = vmatprep.subr.mxu0 0.0
    %63 = vmatpush1.msra.mxu0 0.0
    %64 = vmatprep.subr.mxu0 0.0
    %65 = vmatpush1.msra.mxu0 0.0
    %66 = vmatprep.subr.mxu0 0.0
    %67 = vmatpush1.msra.mxu0 0.0
    %68 = vmatprep.subr.mxu0 0.0
    %69 = vmatpush1.msra.mxu0 0.0
    %70 = vmatprep.subr.mxu0 0.0
    %71 = vmatpush1.msra.mxu0 0.0
    %72 = vmatprep.subr.mxu0 0.0
    %73 = vmatpush1.msra.mxu0 0.0
    %74 = vmatprep.subr.mxu0 0.0
    %75 = vmatpush1.msra.mxu0 0.0
    %76 = vmatprep.subr.mxu0 0.0
    %77 = vmatpush1.msra.mxu0 0.0
    %78 = vmatprep.subr.mxu0 0.0
    %79 = vmatpush1.msra.mxu0 0.0
    %80 = vmatprep.subr.mxu0 0.0
    %81 = vmatpush1.msra.mxu0 0.0
    %82 = vmatprep.subr.mxu0 0.0
    %83 = vmatpush1.msra.mxu0 0.0
    %84 = vmatprep.subr.mxu0 0.0
    %85 = vmatpush1.msra.mxu0 0.0
    %86 = vmatprep.mubr.f32.mxu0 0.0
    %87 = vmatmul.mubr.f32.gmra.mrb[0].mxu0 %v17
    %v88 = vpop.f32.mrb[0].mxu0
    %v89 = vadd.f32 0.0, %v88
    %v90 = vpop.f32.mrb[0].mxu0
    %91 = vmatprep.mubr.f32.mxu0 0.0
    %92 = vmatmul.mubr.f32.gmra.mrb[0].mxu0 %v20
    %v93 = vpop.f32.mrb[0].mxu0
    %v94 = vadd.f32 0.0, %v93
    %v95 = vpop.f32.mrb[0].mxu0
    %96 = vdwg.mxu0
    %v97 = vand.u32 2147483647, %v89
    %vm98 = vcmp.le.f32.partialorder %v97, 0.7853982
    %vm99 = vcmp.lt.s32.totalorder %v89, 0
    %v100 = vand.u32 %v89, 2139095040
    %v101 = vshrl.u32 %v100, 23
    %v102 = vsub.s32 %v101, 127
    %v103 = vand.u32 2147483647, %v89
    %v104 = vand.u32 %v103, 8388607
    %v105 = vor.u32 %v104, 8388608
    %v106 = vsub.s32 0, %v105
    %v107 = vadd.s32 %v102, 1
    %vm108 = vcmp.gt.s32.totalorder %v107, 0
    %v109 = vsel %vm108, %v107, 0
    %v110 = vshrl.u32 %v109, 5
    %v111 = vand.u32 %v109, 31
    %v112 = vsub.s32 32, %v111
    %v113 = vshrl.u32 683565275, %v112
    %v114 = vshll.u32 683565275, %v111
    %v115 = vshrl.u32 2475754826, %v112
    %v116 = vor.u32 %v114, %v115
    %v117 = vshll.u32 2475754826, %v111
    %v118 = vshrl.u32 2131351028, %v112
    %v119 = vor.u32 %v117, %v118
    %v120 = vshll.u32 2131351028, %v111
    %v121 = vshrl.u32 2102212464, %v112
    %v122 = vor.u32 %v120, %v121
    %v123 = vshll.u32 2102212464, %v111
    %v124 = vshrl.u32 920167782, %v112
    %v125 = vor.u32 %v123, %v124
    %v126 = vshll.u32 920167782, %v111
    %v127 = vshrl.u32 1326507024, %v112
    %v128 = vor.u32 %v126, %v127
    %vm129 = vcmp.lt.s32.totalorder %v110, 1
    %vm130 = vcmp.lt.s32.totalorder %v110, 2
    %vm131 = vcmp.lt.s32.totalorder %v110, 3
    %vm132 = vcmp.lt.s32.totalorder %v110, 4
    %v133 = vsel %vm129, %v113, %v116
    %v134 = vsel %vm132, %v122, 2102212464
    %v135 = vsel %vm131, %v119, %v134
    %v136 = vsel %vm130, %v133, %v135
    %v137 = vsel %vm129, %v116, %v119
    %v138 = vsel %vm132, %v125, 920167782
    %v139 = vsel %vm131, %v122, %v138
    %v140 = vsel %vm130, %v137, %v139
    %v141 = vsel %vm129, %v119, %v122
    %v142 = vsel %vm132, %v128, 1326507024
    %v143 = vsel %vm131, %v125, %v142
    %v144 = vsel %vm130, %v141, %v143
    %v145 = vshll.u32 %v105, 8
    %v146 = vmul.u32.u64.compose %v145, %v144
    %v147 = vextract.low.u32 %v146
    %v148 = vextract.high.u32 %v146
    %v149 = vmul.u32.u64.compose %v145, %v140
    %v150 = vextract.low.u32 %v149
    %v151 = vextract.high.u32 %v149
    %v152 = vmul.u32 %v145, %v136
    %v153 = vadd.s32 %v148, %v150
    %vm154 = vc.u32 %v148, %v150
    %v155 = vadd.s32 %v151, 1
    %v156 = vsel %vm154, %v155, %v151
    %v157 = vadd.s32 %v152, %v156
    %v158 = vadd.s32 %v157, 536870912
    %v159 = vshrl.u32 %v158, 30
    %v160 = vshll.u32 %v159, 30
    %v161 = vsub.s32 %v157, %v160
    %vm162 = vcmp.lt.s32.totalorder %v161, 0
    %v163 = vsub.s32 0, %v161
    %v164 = vsel %vm162, %v163, %v161
    %v165 = vclz %v164
    %v166 = vsub.s32 %v165, 2
    %vm167 = vcmp.gt.s32.totalorder 0, %v166
    %v168 = vsel %vm167, 0, %v166
    %v169 = vsub.s32 32, %v168
    %v170 = vshll.u32 %v161, %v168
    %v171 = vshrl.u32 %v153, %v169
    %v172 = vor.u32 %v170, %v171
    %v173 = vsub.s32 4294967266, %v168
    %v174 = vadd.s32 %v173, 127
    %v175 = vshll.u32 %v174, 23
    %v176 = vor.u32 4788187, %v175
    %v177 = vand.u32 2147483647, %v176
    %v179 = vcvt.s32.f32 %v172
    %v180 = vmul.f32 %v179, %v177
    %v181 = vxor.u32 %v180, 2147483648
    %v182 = vsel %vm99, %v181, %v180
    %v183 = vsub.s32 4, %v159
    %v184 = vsel %vm99, %v183, %v159
    %v185 = vsel %vm98, %v89, %v182
    %v186 = vsel %vm98, 0, %v184
    %v187 = vcosq.f32.pop %v185
    %v188 = vsinq.f32.pop %v185
    %vm189 = vweird.f32 %v89
    %v190 = vand.u32 %v186, 3
    %vm191 = vcmp.lt.s32.totalorder %v190, 2
    %vm192 = vcmp.eq.s32.totalorder %v190, 0
    %v193 = vxor.u32 %v188, 2147483648
    %v194 = vsel %vm192, %v187, %v193
    %vm195 = vcmp.eq.s32.totalorder %v190, 2
    %v196 = vxor.u32 %v187, 2147483648
    %v197 = vsel %vm195, %v196, %v188
    %v198 = vsel %vm191, %v194, %v197
    %v199 = vsel %vm189, nan, %v198
    %v200 = vand.u32 2147483647, %v94
    %vm201 = vcmp.le.f32.partialorder %v200, 0.7853982
    %vm202 = vcmp.lt.s32.totalorder %v94, 0
    %v203 = vand.u32 %v94, 2139095040
    %v204 = vshrl.u32 %v203, 23
    %v205 = vsub.s32 %v204, 127
    %v206 = vand.u32 2147483647, %v94
    %v207 = vand.u32 %v206, 8388607
    %v208 = vor.u32 %v207, 8388608
    %v209 = vsub.s32 0, %v208
    %v210 = vadd.s32 %v205, 1
    %vm211 = vcmp.gt.s32.totalorder %v210, 0
    %v212 = vsel %vm211, %v210, 0
    %v213 = vshrl.u32 %v212, 5
    %v214 = vand.u32 %v212, 31
    %v215 = vsub.s32 32, %v214
    %v216 = vshrl.u32 683565275, %v215
    %v217 = vshll.u32 683565275, %v214
    %v218 = vshrl.u32 2475754826, %v215
    %v219 = vor.u32 %v217, %v218
    %v220 = vshll.u32 2475754826, %v214
    %v221 = vshrl.u32 2131351028, %v215
    %v222 = vor.u32 %v220, %v221
    %v223 = vshll.u32 2131351028, %v214
    %v224 = vshrl.u32 2102212464, %v215
    %v225 = vor.u32 %v223, %v224
    %v226 = vshll.u32 2102212464, %v214
    %v227 = vshrl.u32 920167782, %v215
    %v228 = vor.u32 %v226, %v227
    %v229 = vshll.u32 920167782, %v214
    %v230 = vshrl.u32 1326507024, %v215
    %v231 = vor.u32 %v229, %v230
    %vm232 = vcmp.lt.s32.totalorder %v213, 1
    %vm233 = vcmp.lt.s32.totalorder %v213, 2
    %vm234 = vcmp.lt.s32.totalorder %v213, 3
    %vm235 = vcmp.lt.s32.totalorder %v213, 4
    %v236 = vsel %vm232, %v216, %v219
    %v237 = vsel %vm235, %v225, 2102212464
    %v238 = vsel %vm234, %v222, %v237
    %v239 = vsel %vm233, %v236, %v238
    %v240 = vsel %vm232, %v219, %v222
    %v241 = vsel %vm235, %v228, 920167782
    %v242 = vsel %vm234, %v225, %v241
    %v243 = vsel %vm233, %v240, %v242
    %v244 = vsel %vm232, %v222, %v225
    %v245 = vsel %vm235, %v231, 1326507024
    %v246 = vsel %vm234, %v228, %v245
    %v247 = vsel %vm233, %v244, %v246
    %v248 = vshll.u32 %v208, 8
    %v249 = vmul.u32.u64.compose %v248, %v247
    %v250 = vextract.low.u32 %v249
    %v251 = vextract.high.u32 %v249
    %v252 = vmul.u32.u64.compose %v248, %v243
    %v253 = vextract.low.u32 %v252
    %v254 = vextract.high.u32 %v252
    %v255 = vmul.u32 %v248, %v239
    %v256 = vadd.s32 %v251, %v253
    %vm257 = vc.u32 %v251, %v253
    %v258 = vadd.s32 %v254, 1
    %v259 = vsel %vm257, %v258, %v254
    %v260 = vadd.s32 %v255, %v259
    %v261 = vadd.s32 %v260, 536870912
    %v262 = vshrl.u32 %v261, 30
    %v263 = vshll.u32 %v262, 30
    %v264 = vsub.s32 %v260, %v263
    %vm265 = vcmp.lt.s32.totalorder %v264, 0
    %v266 = vsub.s32 0, %v264
    %v267 = vsel %vm265, %v266, %v264
    %v268 = vclz %v267
    %v269 = vsub.s32 %v268, 2
    %vm270 = vcmp.gt.s32.totalorder 0, %v269
    %v271 = vsel %vm270, 0, %v269
    %v272 = vsub.s32 32, %v271
    %v273 = vshll.u32 %v264, %v271
    %v274 = vshrl.u32 %v256, %v272
    %v275 = vor.u32 %v273, %v274
    %v276 = vsub.s32 4294967266, %v271
    %v277 = vadd.s32 %v276, 127
    %v278 = vshll.u32 %v277, 23
    %v279 = vor.u32 4788187, %v278
    %v280 = vand.u32 2147483647, %v279
    %v282 = vcvt.s32.f32 %v275
    %v283 = vmul.f32 %v282, %v280
    %v284 = vxor.u32 %v283, 2147483648
    %v285 = vsel %vm202, %v284, %v283
    %v286 = vsub.s32 4, %v262
    %v287 = vsel %vm202, %v286, %v262
    %v288 = vsel %vm201, %v94, %v285
    %v289 = vsel %vm201, 0, %v287
    %v290 = vcosq.f32.pop %v288
    %v291 = vsinq.f32.pop %v288
    %vm292 = vweird.f32 %v94
    %v293 = vand.u32 %v289, 3
    %vm294 = vcmp.lt.s32.totalorder %v293, 2
    %vm295 = vcmp.eq.s32.totalorder %v293, 0
    %v296 = vxor.u32 %v291, 2147483648
    %v297 = vsel %vm295, %v290, %v296
    %vm298 = vcmp.eq.s32.totalorder %v293, 2
    %v299 = vxor.u32 %v290, 2147483648
    %v300 = vsel %vm298, %v299, %v291
    %v301 = vsel %vm294, %v297, %v300
    %v302 = vsel %vm292, nan, %v301
    %303 = vst [vmem:[#allocation2] sm:$0xff] %v199
    %304 = vst [vmem:[#allocation2 + $0x8] sm:$0xff] %v302
    // Predicated region
    $region10: #{tpu_custom_call.1} parent=1 // pred_check
      _
    $region11: #{tpu_custom_call.1} parent=1 // pred_check_branch
      %306 = sbr.rel (0) target = $region13
    $region12: #{tpu_custom_call.1} parent=1 // pred_region
      %s308 = ssub.s32 256, 256
      %309 = vsyncadd [#allocation3], %s308
      %s310 = sshll.u32 [#allocation2], 4
      %s311 = int_to_ptr.vmem [resolvable:$true] %s310
      %316 = dma.vmem_to_hbm [thread:$0]  %s311, 256, %s2, [#allocation3], 128, 128, 8
    $region13: #{tpu_custom_call.1} parent=1 // pred_fallthru
      _
    // Predicated region
    $region14: #{tpu_custom_call.1} parent=1 // pred_check
      _
    $region15: #{tpu_custom_call.1} parent=1 // pred_check_branch
      %318 = sbr.rel (0) target = $region17
    $region16: #{tpu_custom_call.1} parent=1 // pred_region
      %319 = dma.done [#allocation3], 256
    $region17: #{tpu_custom_call.1} parent=1 // pred_fallthru
      _
    %320 = vsyncpa [#allocation3], 1

</llo_original>
